<compile_context>
chip_gen: v7x
topology: tpu7x:2x2x1
jax: 0.10.0
libtpu: 0.0.40
codegen_flags: <defaults>
</compile_context>

<pallas_src>
import functools

import jax
import jax.numpy as jnp
from jax import lax
from jax.experimental import pallas as pl
from jax.experimental.pallas import tpu as pltpu

_LANE = 128


def _batchnorm_kernel(x_ref, gamma_ref, beta_ref, o_ref, *, eps, n_batch):
    # x tile: (n_batch, TILE_N); gamma/beta tiles: (1, TILE_N).
    x = x_ref[...].astype(jnp.float32)
    inv_b = jnp.float32(1.0 / n_batch)

    # Single pass: sum(x) and sum(x*x) over the batch (sublane) axis.
    mean = jnp.sum(x, axis=0, keepdims=True) * inv_b                 # (1, TILE_N)
    mean_sq = jnp.sum(x * x, axis=0, keepdims=True) * inv_b          # (1, TILE_N)
    # biased variance (unbiased=False); clamp tiny negative cancellation noise.
    var = jnp.maximum(mean_sq - mean * mean, 0.0)                    # (1, TILE_N)

    # Per-neuron scale/shift (rsqrt on N elements, not B*N).
    inv_std = lax.rsqrt(var + jnp.float32(eps))                      # (1, TILE_N)
    scale = gamma_ref[...].astype(jnp.float32) * inv_std             # (1, TILE_N)
    shift = beta_ref[...].astype(jnp.float32) - mean * scale         # (1, TILE_N)

    # Inner loop: one multiply-add per element.
    o_ref[...] = (x * scale + shift).astype(o_ref.dtype)


def custom_batchnorm_forward(x, gamma, beta, eps=1e-5):
    """x: (n_batch, n_neurons) float32; gamma/beta: (n_neurons,) float32."""
    n_batch, n_neurons = x.shape

    # --- pick a lane-dense tile width ---------------------------------------
    # Double-buffered working set per step ~= 2*(x tile) + 2*(out tile)
    #   = 4 * n_batch * TILE_N * 4 bytes.  Keep it under ~12 MiB so the same
    # constant is safe for v5e's 16 MiB scoped default, v6e, and v7x.
    vmem_budget = 12 * 1024 * 1024
    bytes_per_lane = 4 * n_batch * 4
    tile_cap = max(_LANE, (vmem_budget // bytes_per_lane) // _LANE * _LANE)
    tile_cap = min(tile_cap, 2048)                      # keep DMAs reasonable
    n_aligned = pl.cdiv(n_neurons, _LANE) * _LANE       # lane-dense width
    tile_n = min(tile_cap, n_aligned)

    # --- pad the neuron axis so it divides into lane-dense tiles -------------
    n_pad = pl.cdiv(n_neurons, tile_n) * tile_n
    if n_pad != n_neurons:
        pad = n_pad - n_neurons
        x_p = jnp.pad(x, ((0, 0), (0, pad)))
        gamma_p = jnp.pad(gamma, (0, pad))
        beta_p = jnp.pad(beta, (0, pad))
    else:
        x_p, gamma_p, beta_p = x, gamma, beta
    gamma2d = gamma_p.reshape(1, n_pad)
    beta2d = beta_p.reshape(1, n_pad)

    kernel = functools.partial(_batchnorm_kernel, eps=eps, n_batch=n_batch)

    cost = pl.CostEstimate(
        flops=5 * n_batch * n_pad,
        transcendentals=n_pad,
        bytes_accessed=8 * n_batch * n_pad + 8 * n_pad,
    )

    out_p = pl.pallas_call(
        kernel,
        out_shape=jax.ShapeDtypeStruct((n_batch, n_pad), x.dtype),
        grid_spec=pltpu.PrefetchScalarGridSpec(
            num_scalar_prefetch=0,
            grid=(n_pad // tile_n,),
            in_specs=[
                pl.BlockSpec((n_batch, tile_n), lambda j: (0, j)),
                pl.BlockSpec((1, tile_n), lambda j: (0, j)),
                pl.BlockSpec((1, tile_n), lambda j: (0, j)),
            ],
            out_specs=pl.BlockSpec((n_batch, tile_n), lambda j: (0, j)),
        ),
        compiler_params=pltpu.CompilerParams(
            dimension_semantics=("parallel",),   # independent neuron tiles
            vmem_limit_bytes=32 * 1024 * 1024,
        ),
        cost_estimate=cost,
    )(x_p, gamma2d, beta2d)

    if n_pad != n_neurons:
        out_p = out_p[:, :n_neurons]
    return out_p


if __name__ == "__main__":
    # Module __init__: gamma = ones(n_neurons), beta = zeros(n_neurons).
    # Use a slightly perturbed (deterministic) gamma/beta so the affine part
    # of the kernel is actually exercised.
    n_batch, n_neurons = 8, 32
    eps = 1e-5

    key = jax.random.PRNGKey(0)
    kx, kg, kb = jax.random.split(key, 3)
    x = jax.random.normal(kx, (n_batch, n_neurons), dtype=jnp.float32)
    gamma = jnp.ones((n_neurons,), dtype=jnp.float32) \
        + 0.1 * jax.random.normal(kg, (n_neurons,), dtype=jnp.float32)
    beta = jnp.zeros((n_neurons,), dtype=jnp.float32) \
        + 0.1 * jax.random.normal(kb, (n_neurons,), dtype=jnp.float32)

    out = custom_batchnorm_forward(x, gamma, beta, eps)
    out = jax.block_until_ready(out)

    # Pure-JAX reference (mirrors the PyTorch forward exactly).
    mean = x.mean(axis=0)
    var = ((x - mean) ** 2).mean(axis=0)  # unbiased=False
    ref = (x - mean) / jnp.sqrt(var + eps) * gamma + beta

    assert out.shape == (n_batch, n_neurons)
    assert jnp.allclose(out, ref, atol=1e-5, rtol=1e-5), (
        f"max abs err {jnp.max(jnp.abs(out - ref))}"
    )
    print("KERNEL_OK")
</pallas_src>

<mosaic_0001>
module attributes {stable_mosaic.version = 11 : i64} {
  func.func @_batchnorm_kernel(%arg0: i32, %arg1: memref<8x128xf32, #tpu.memory_space<vmem>>, %arg2: memref<1x128xf32, #tpu.memory_space<vmem>>, %arg3: memref<1x128xf32, #tpu.memory_space<vmem>>, %arg4: memref<8x128xf32, #tpu.memory_space<vmem>>) attributes {dimension_semantics = [#tpu.dimension_semantics<parallel>], iteration_bounds = array<i64: 1>, scalar_prefetch = 0 : i64, scratch_operands = 0 : i64, tpu.core_type = #tpu.core_type<tc>, window_params = [{transform_indices = @transform_0, window_bounds = array<i64: 8, 128>}, {transform_indices = @transform_1, window_bounds = array<i64: 1, 128>}, {transform_indices = @transform_2, window_bounds = array<i64: 1, 128>}, {transform_indices = @transform_3, window_bounds = array<i64: 8, 128>}]} {
    %c0 = arith.constant 0 : index
    %c0_0 = arith.constant 0 : index
    %0 = vector.load %arg1[%c0, %c0_0] : memref<8x128xf32, #tpu.memory_space<vmem>>, vector<8x128xf32>
    %cst = arith.constant dense<0.000000e+00> : vector<128xf32>
    %1 = vector.multi_reduction <add>, %0, %cst [0] : vector<8x128xf32> to vector<128xf32>
    %2 = vector.shape_cast %1 : vector<128xf32> to vector<1x128xf32>
    %cst_1 = arith.constant 1.250000e-01 : f32
    %3 = vector.broadcast %cst_1 : f32 to vector<1x128xf32>
    %4 = arith.mulf %2, %3 : vector<1x128xf32>
    %5 = arith.mulf %0, %0 : vector<8x128xf32>
    %cst_2 = arith.constant dense<0.000000e+00> : vector<128xf32>
    %6 = vector.multi_reduction <add>, %5, %cst_2 [0] : vector<8x128xf32> to vector<128xf32>
    %7 = vector.shape_cast %6 : vector<128xf32> to vector<1x128xf32>
    %cst_3 = arith.constant 1.250000e-01 : f32
    %8 = vector.broadcast %cst_3 : f32 to vector<1x128xf32>
    %9 = arith.mulf %7, %8 : vector<1x128xf32>
    %10 = arith.mulf %4, %4 : vector<1x128xf32>
    %11 = arith.subf %9, %10 : vector<1x128xf32>
    %cst_4 = arith.constant 0.000000e+00 : f32
    %12 = vector.broadcast %cst_4 : f32 to vector<1x128xf32>
    %13 = arith.maximumf %11, %12 : vector<1x128xf32>
    %cst_5 = arith.constant 9.99999974E-6 : f32
    %14 = vector.broadcast %cst_5 : f32 to vector<1x128xf32>
    %15 = arith.addf %13, %14 : vector<1x128xf32>
    %16 = math.rsqrt %15 : vector<1x128xf32>
    %c0_6 = arith.constant 0 : index
    %c0_7 = arith.constant 0 : index
    %17 = vector.load %arg2[%c0_6, %c0_7] : memref<1x128xf32, #tpu.memory_space<vmem>>, vector<1x128xf32>
    %18 = arith.mulf %17, %16 : vector<1x128xf32>
    %c0_8 = arith.constant 0 : index
    %c0_9 = arith.constant 0 : index
    %19 = vector.load %arg3[%c0_8, %c0_9] : memref<1x128xf32, #tpu.memory_space<vmem>>, vector<1x128xf32>
    %20 = arith.mulf %4, %18 : vector<1x128xf32>
    %21 = arith.subf %19, %20 : vector<1x128xf32>
    %22 = vector.broadcast %18 : vector<1x128xf32> to vector<8x128xf32>
    %23 = arith.mulf %0, %22 : vector<8x128xf32>
    %24 = vector.broadcast %21 : vector<1x128xf32> to vector<8x128xf32>
    %25 = arith.addf %23, %24 : vector<8x128xf32>
    %c0_10 = arith.constant 0 : index
    %c0_11 = arith.constant 0 : index
    %26 = vector.load %arg4[%c0_10, %c0_11] : memref<8x128xf32, #tpu.memory_space<vmem>>, vector<8x128xf32>
    tpu.vector_store %arg4[%c0_10, %c0_11], %25 {strides = array<i32>} : memref<8x128xf32, #tpu.memory_space<vmem>>, vector<8x128xf32>,
    return
  }
  func.func @transform_0(%arg0: i32) -> (i32, i32) {
    %c0_i32 = arith.constant 0 : i32
    %c0_i32_0 = arith.constant 0 : i32
    return %c0_i32, %arg0 : i32, i32
  }
  func.func @transform_1(%arg0: i32) -> (i32, i32) {
    %c0_i32 = arith.constant 0 : i32
    %c0_i32_0 = arith.constant 0 : i32
    return %c0_i32, %arg0 : i32, i32
  }
  func.func @transform_2(%arg0: i32) -> (i32, i32) {
    %c0_i32 = arith.constant 0 : i32
    %c0_i32_0 = arith.constant 0 : i32
    return %c0_i32, %arg0 : i32, i32
  }
  func.func @transform_3(%arg0: i32) -> (i32, i32) {
    %c0_i32 = arith.constant 0 : i32
    %c0_i32_0 = arith.constant 0 : i32
    return %c0_i32, %arg0 : i32, i32
  }
}

</mosaic_0001>

<llo_original>
// kernel: tpu_custom_call.1
$region0: #{tpu_custom_call.1}
  #allocation0 [shape = 'u32[]', space=smem, size = 0x4, offset = 0x4, fixed_abs, tag = 'smem constant byte address 0x4 - core index']
  #allocation1 [shape = 'u32[144,128]{1,0:T(1,128)}', space=vmem, size = 0x12000, scoped, tag = 'internal scratch']
  %s0 = inlined_call_operand.hbm [shape: f32[8,128], index: 0, kind: input, shape index: {}]
  %s1 = inlined_call_operand.vmem [shape: f32[1,128], index: 1, kind: input, shape index: {}]
  %s2 = inlined_call_operand.vmem [shape: f32[1,128], index: 2, kind: input, shape index: {}]
  %s3 = inlined_call_operand.hbm [shape: f32[8,128], index: 3, kind: output, shape index: {}]
  %s4 = sld [smem:[#allocation0]]
  $region26: #{tpu_custom_call.1} parent=0
    _
  %s6 = ssub.s32 1, %s4
  %s7 = scalar_select 0, %s6, %s4
  $region1: #{tpu_custom_call.1} parent=0
    #allocation2 [shape = 'u8[4096]{0}', space=vmem, size = 0x1000, scoped, tag = 'input window, operand 0, single buffered']
    #allocation3 [shape = 's32[1]{0}', space=sflag, size = 0x4, scoped, tag = 'scoped memory for tpu_custom_call.1']
    #allocation4 [shape = 's32[1]{0}', space=sflag, size = 0x4, scoped, tag = 'scoped memory for tpu_custom_call.1']
    #allocation5 [shape = 'u8[4096]{0}', space=vmem, size = 0x1000, scoped, tag = 'output window, operand 0, single buffered']
    %8 = vsyncpa [#allocation3], 0
    %9 = vsyncpa [#allocation4], 0
    // Predicated region
    $region2: #{tpu_custom_call.1} parent=1 // pred_check
      _
    $region3: #{tpu_custom_call.1} parent=1 // pred_check_branch
      %11 = sbr.rel (0) target = $region5
    $region4: #{tpu_custom_call.1} parent=1 // pred_region
      %s13 = ssub.s32 128, 128
      %14 = vsyncadd [#allocation3], %s13
      %s16 = sshll.u32 [#allocation2], 4
      %s17 = int_to_ptr.vmem [resolvable:$true] %s16
      %19 = dma.hbm_to_vmem [thread:$0]  %s0, 128, %s17, [#allocation3]
    $region5: #{tpu_custom_call.1} parent=1 // pred_fallthru
      _
    // Predicated region
    $region6: #{tpu_custom_call.1} parent=1 // pred_check
      _
    $region7: #{tpu_custom_call.1} parent=1 // pred_check_branch
      %21 = sbr.rel (0) target = $region9
    $region8: #{tpu_custom_call.1} parent=1 // pred_region
      _
    $region9: #{tpu_custom_call.1} parent=1 // pred_fallthru
      _
    // Predicated region
    $region10: #{tpu_custom_call.1} parent=1 // pred_check
      _
    $region11: #{tpu_custom_call.1} parent=1 // pred_check_branch
      %23 = sbr.rel (0) target = $region13
    $region12: #{tpu_custom_call.1} parent=1 // pred_region
      _
    $region13: #{tpu_custom_call.1} parent=1 // pred_fallthru
      _
    // Predicated region
    $region14: #{tpu_custom_call.1} parent=1 // pred_check
      _
    $region15: #{tpu_custom_call.1} parent=1 // pred_check_branch
      %25 = sbr.rel (0) target = $region17
    $region16: #{tpu_custom_call.1} parent=1 // pred_region
      %26 = dma.done [#allocation3], 128
    $region17: #{tpu_custom_call.1} parent=1 // pred_fallthru
      _
    %v27 = vld [vmem:[#allocation2] sm:$0xff]
    %v28 = vrot.slane %v27, 4
    %v29 = vadd.f32 %v27, %v28
    %v30 = vrot.slane %v29, 2
    %v31 = vadd.f32 %v29, %v30
    %v32 = vrot.slane %v31, 1
    %v33 = vadd.f32 %v31, %v32
    %v34 = vmul.f32 %v33, 0.125
    %v35 = vmul.f32 %v27, %v27
    %v36 = vrot.slane %v35, 4
    %v37 = vadd.f32 %v35, %v36
    %v38 = vrot.slane %v37, 2
    %v39 = vadd.f32 %v37, %v38
    %v40 = vrot.slane %v39, 1
    %v41 = vadd.f32 %v39, %v40
    %v42 = vmul.f32 %v41, 0.125
    %v43 = vmul.f32 %v34, %v34
    %v44 = vsub.f32 %v42, %v43
    %v45 = vmax.f32 %v44, 0.0
    %v46 = vadd.f32 %v45, 1e-05
    %v47 = vrsqrt.pop %v46
    %v48 = vld [vmem:[%s1] sm:$0x1]
    %v49 = vmul.f32 %v48, %v47
    %v50 = vld [vmem:[%s2] sm:$0x1]
    %v51 = vmul.f32 %v34, %v49
    %v52 = vsub.f32 %v50, %v51
    %v54 = vlaneseq
    %v55 = vshrl.u32 %v54, 7
    %v56 = vsub.s32 0, %v55
    %v57 = vrot.slane %v49, %v56
    %v59 = vmul.f32 %v27, %v57
    %v61 = vlaneseq
    %v62 = vshrl.u32 %v61, 7
    %v63 = vsub.s32 0, %v62
    %v64 = vrot.slane %v52, %v63
    %v66 = vadd.f32 %v59, %v64
    %67 = vst [vmem:[#allocation5] sm:$0xff] %v66
    // Predicated region
    $region18: #{tpu_custom_call.1} parent=1 // pred_check
      _
    $region19: #{tpu_custom_call.1} parent=1 // pred_check_branch
      %69 = sbr.rel (0) target = $region21
    $region20: #{tpu_custom_call.1} parent=1 // pred_region
      %s71 = ssub.s32 128, 128
      %72 = vsyncadd [#allocation4], %s71
      %s74 = sshll.u32 [#allocation5], 4
      %s75 = int_to_ptr.vmem [resolvable:$true] %s74
      %77 = dma.vmem_to_hbm [thread:$0]  %s75, 128, %s3, [#allocation4]
    $region21: #{tpu_custom_call.1} parent=1 // pred_fallthru
      _
    // Predicated region
    $region22: #{tpu_custom_call.1} parent=1 // pred_check
      _
    $region23: #{tpu_custom_call.1} parent=1 // pred_check_branch
      %79 = sbr.rel (0) target = $region25
    $region24: #{tpu_custom_call.1} parent=1 // pred_region
      %80 = dma.done [#allocation4], 128
    $region25: #{tpu_custom_call.1} parent=1 // pred_fallthru
      _
    %81 = vsyncpa [#allocation3], 1
    %82 = vsyncpa [#allocation4], 1

</llo_original>
